<compile_context>
chip_gen: v6e
topology: v6e:2x2x1
jax: 0.10.0
libtpu: 0.0.40
codegen_flags: <defaults>
</compile_context>

<pallas_src>
import jax
import jax.numpy as jnp
import numpy as np
from jax.experimental import pallas as pl
from jax.experimental.pallas import tpu as pltpu


def _rayleigh_kernel(a_ref, xc_ref, xrow_ref, o_ref):
    """One row-block of the Hermitian Rayleigh quotient (real part only).

    a_ref   : (2, tm, n) f32 -- stacked [Ar; Ai] rows for this block
    xc_ref  : (tm, 2)    f32 -- [xr | xi] entries for this row block (column form)
    xrow_ref: (2, n)     f32 -- full [xr; xi] in row form
    o_ref   : (1, 1)     f32 -- running real-part accumulator (same block each step)
    """
    @pl.when(pl.program_id(0) == 0)
    def _init():
        o_ref[...] = jnp.zeros_like(o_ref)

    ar = a_ref[0]                      # (tm, n)
    ai = a_ref[1]                      # (tm, n)
    xr_c = xc_ref[:, 0:1]              # (tm, 1)
    xi_c = xc_ref[:, 1:2]              # (tm, 1)
    xr_r = xrow_ref[0:1, :]            # (1, n)
    xi_r = xrow_ref[1:2, :]            # (1, n)

    # conj(x_i) * x_j = P_ij + i Q_ij  (broadcasted outer products on the VPU)
    p = xr_c * xr_r + xi_c * xi_r      # (tm, n)
    q = xr_c * xi_r - xi_c * xr_r      # (tm, n)

    # Re(x^H A x) contribution of this row block; Im is analytically 0 for
    # Hermitian A, so it is not computed.
    o_ref[...] += jnp.sum(ar * p - ai * q, keepdims=True)


def _pick_tm(n: int, budget_bytes: int = 8 * 1024 * 1024) -> int:
    """Largest row-tile with 2 planes * 2 buffers * tm * n * 4B <= budget."""
    max_tm = budget_bytes // (2 * 2 * n * 4)
    if n <= max_tm:
        return n
    tm = max(8, (max_tm // 8) * 8)
    while tm > 8 and n % tm != 0:
        tm -= 8
    if n % tm == 0:
        return tm
    return n  # fallback: single full block


def rayleigh_quotient(A: jnp.ndarray, x: jnp.ndarray, tm: int | None = None) -> jnp.ndarray:
    """A: (n, n) complex64 Hermitian; x: (n, 1) complex64. Returns (1,1) complex64."""
    n = A.shape[0]
    if tm is None:
        tm = _pick_tm(n)
    assert n % tm == 0 and (tm == n or tm % 8 == 0), (n, tm)

    a2 = jnp.stack([jnp.real(A), jnp.imag(A)]).astype(jnp.float32)          # (2, n, n)
    xcol = jnp.concatenate([jnp.real(x), jnp.imag(x)], axis=1).astype(jnp.float32)  # (n, 2)
    xrow = jnp.transpose(xcol)                                              # (2, n)

    grid_spec = pltpu.PrefetchScalarGridSpec(
        num_scalar_prefetch=0,
        grid=(n // tm,),
        in_specs=[
            pl.BlockSpec((2, tm, n), lambda i: (0, i, 0)),   # stacked A row block
            pl.BlockSpec((tm, 2), lambda i: (i, 0)),         # x slice, column form
            pl.BlockSpec((2, n), lambda i: (0, 0)),          # full x, row form
        ],
        out_specs=pl.BlockSpec((1, 1), lambda i: (0, 0)),    # resident accumulator
    )

    out_r = pl.pallas_call(
        _rayleigh_kernel,
        out_shape=jax.ShapeDtypeStruct((1, 1), jnp.float32),
        grid_spec=grid_spec,
        compiler_params=pltpu.CompilerParams(
            dimension_semantics=("arbitrary",)),              # reduction axis
    )(a2, xcol, xrow)

    # Hermitian A => exactly-real quotient; re-attach the zero imaginary part.
    return out_r.astype(jnp.complex64)


def _make_inputs(key, n):
    k1, k2, k3, k4 = jax.random.split(key, 4)
    br = jax.random.normal(k1, (n, n), dtype=jnp.float32)
    bi = jax.random.normal(k2, (n, n), dtype=jnp.float32)
    B = (br + 1j * bi).astype(jnp.complex64)
    A = 0.5 * (B + jnp.conj(B.T))                            # Hermitian

    wr = jax.random.normal(k3, (n, 1), dtype=jnp.float32)
    wi = jax.random.normal(k4, (n, 1), dtype=jnp.float32)
    x = (wr + 1j * wi).astype(jnp.complex64)
    x = x / jnp.sqrt(jnp.sum(jnp.abs(x) ** 2)).astype(jnp.complex64)  # ComplexSphere
    return A, x


def _ref(A, x):
    # high-precision host reference
    A_np = np.asarray(A).astype(np.complex128)
    x_np = np.asarray(x).astype(np.complex128)
    return np.conj(x_np.T) @ A_np @ x_np


if __name__ == "__main__":
    # main check: n = 32 (single-block path)
    n = 32
    A, x = _make_inputs(jax.random.PRNGKey(0), n)
    out = jax.block_until_ready(rayleigh_quotient(A, x))
    ref = _ref(A, x)
    assert out.shape == (1, 1) and out.dtype == jnp.complex64
    assert jnp.allclose(out, ref, atol=1e-4, rtol=1e-4)

    # also exercise the row-tiled accumulation path (multi-step grid)
    n2 = 128
    A2, x2 = _make_inputs(jax.random.PRNGKey(0), n2)
    out2 = jax.block_until_ready(rayleigh_quotient(A2, x2, tm=32))
    ref2 = _ref(A2, x2)
    assert jnp.allclose(out2, ref2, atol=1e-3, rtol=1e-3)

    print("KERNEL_OK")
</pallas_src>

<mosaic_0001>
module attributes {stable_mosaic.version = 11 : i64} {
  func.func @_rayleigh_kernel(%arg0: i32, %arg1: memref<2x32x32xf32, #tpu.memory_space<vmem>>, %arg2: memref<32x2xf32, #tpu.memory_space<vmem>>, %arg3: memref<2x32xf32, #tpu.memory_space<vmem>>, %arg4: memref<1x1xf32, #tpu.memory_space<vmem>>) attributes {dimension_semantics = [#tpu.dimension_semantics<arbitrary>], iteration_bounds = array<i64: 1>, scalar_prefetch = 0 : i64, scratch_operands = 0 : i64, tpu.core_type = #tpu.core_type<tc>, window_params = [{transform_indices = @transform_0, window_bounds = array<i64: 2, 32, 32>}, {transform_indices = @transform_1, window_bounds = array<i64: 32, 2>}, {pipeline_mode = #tpu.pipeline_mode<synchronous>, transform_indices = @transform_2, window_bounds = array<i64: 2, 32>}, {pipeline_mode = #tpu.pipeline_mode<synchronous>, transform_indices = @transform_3, window_bounds = array<i64: 1, 1>}]} {
    %c0_i32 = arith.constant 0 : i32
    %0 = arith.cmpi eq, %arg0, %c0_i32 : i32
    %1 = arith.extui %0 : i1 to i32
    %c0_i32_0 = arith.constant 0 : i32
    %2 = arith.cmpi ne, %1, %c0_i32_0 : i32
    scf.if %2 {
      %cst_17 = arith.constant 0.000000e+00 : f32
      %36 = vector.broadcast %cst_17 : f32 to vector<1x1xf32>
      %c0_18 = arith.constant 0 : index
      %c0_19 = arith.constant 0 : index
      %37 = vector.load %arg4[%c0_18, %c0_19] : memref<1x1xf32, #tpu.memory_space<vmem>>, vector<1x1xf32>
      tpu.vector_store %arg4[%c0_18, %c0_19], %36 {strides = array<i32>} : memref<1x1xf32, #tpu.memory_space<vmem>>, vector<1x1xf32>,
    } else {
    }
    %c0 = arith.constant 0 : index
    %c0_1 = arith.constant 0 : index
    %c0_2 = arith.constant 0 : index
    %3 = vector.load %arg1[%c0, %c0_1, %c0_2] : memref<2x32x32xf32, #tpu.memory_space<vmem>>, vector<1x32x32xf32>
    %4 = vector.shape_cast %3 : vector<1x32x32xf32> to vector<32x32xf32>
    %c1 = arith.constant 1 : index
    %c0_3 = arith.constant 0 : index
    %c0_4 = arith.constant 0 : index
    %5 = vector.load %arg1[%c1, %c0_3, %c0_4] : memref<2x32x32xf32, #tpu.memory_space<vmem>>, vector<1x32x32xf32>
    %6 = vector.shape_cast %5 : vector<1x32x32xf32> to vector<32x32xf32>
    %c0_5 = arith.constant 0 : index
    %c0_6 = arith.constant 0 : index
    %7 = vector.load %arg2[%c0_5, %c0_6] : memref<32x2xf32, #tpu.memory_space<vmem>>, vector<32x1xf32>
    %c0_7 = arith.constant 0 : index
    %c1_8 = arith.constant 1 : index
    %8 = vector.load %arg2[%c0_7, %c1_8] : memref<32x2xf32, #tpu.memory_space<vmem>>, vector<32x1xf32>
    %c0_9 = arith.constant 0 : index
    %c0_10 = arith.constant 0 : index
    %9 = vector.load %arg3[%c0_9, %c0_10] : memref<2x32xf32, #tpu.memory_space<vmem>>, vector<1x32xf32>
    %c1_11 = arith.constant 1 : index
    %c0_12 = arith.constant 0 : index
    %10 = vector.load %arg3[%c1_11, %c0_12] : memref<2x32xf32, #tpu.memory_space<vmem>>, vector<1x32xf32>
    %11 = vector.broadcast %7 : vector<32x1xf32> to vector<32x32xf32>
    %12 = vector.broadcast %9 : vector<1x32xf32> to vector<32x32xf32>
    %13 = arith.mulf %11, %12 : vector<32x32xf32>
    %14 = vector.broadcast %8 : vector<32x1xf32> to vector<32x32xf32>
    %15 = vector.broadcast %10 : vector<1x32xf32> to vector<32x32xf32>
    %16 = arith.mulf %14, %15 : vector<32x32xf32>
    %17 = arith.addf %13, %16 : vector<32x32xf32>
    %18 = vector.broadcast %7 : vector<32x1xf32> to vector<32x32xf32>
    %19 = vector.broadcast %10 : vector<1x32xf32> to vector<32x32xf32>
    %20 = arith.mulf %18, %19 : vector<32x32xf32>
    %21 = vector.broadcast %8 : vector<32x1xf32> to vector<32x32xf32>
    %22 = vector.broadcast %9 : vector<1x32xf32> to vector<32x32xf32>
    %23 = arith.mulf %21, %22 : vector<32x32xf32>
    %24 = arith.subf %20, %23 : vector<32x32xf32>
    %c0_13 = arith.constant 0 : index
    %c0_14 = arith.constant 0 : index
    %25 = vector.load %arg4[%c0_13, %c0_14] : memref<1x1xf32, #tpu.memory_space<vmem>>, vector<1x1xf32>
    %26 = arith.mulf %4, %17 : vector<32x32xf32>
    %27 = arith.mulf %6, %24 : vector<32x32xf32>
    %28 = arith.subf %26, %27 : vector<32x32xf32>
    %29 = vector.shape_cast %28 : vector<32x32xf32> to vector<1x32x32xf32>
    %cst = arith.constant dense<0.000000e+00> : vector<1xf32>
    %30 = vector.multi_reduction <add>, %29, %cst [1, 2] : vector<1x32x32xf32> to vector<1xf32>
    %31 = vector.shape_cast %30 : vector<1xf32> to vector<1x1x1xf32>
    %32 = vector.extract %31[0, 0, 0] : f32 from vector<1x1x1xf32>
    %33 = vector.broadcast %32 : f32 to vector<1x1xf32>
    %34 = arith.addf %25, %33 : vector<1x1xf32>
    %c0_15 = arith.constant 0 : index
    %c0_16 = arith.constant 0 : index
    %35 = vector.load %arg4[%c0_15, %c0_16] : memref<1x1xf32, #tpu.memory_space<vmem>>, vector<1x1xf32>
    tpu.vector_store %arg4[%c0_15, %c0_16], %34 {strides = array<i32>} : memref<1x1xf32, #tpu.memory_space<vmem>>, vector<1x1xf32>,
    return
  }
  func.func @transform_0(%arg0: i32) -> (i32, i32, i32) {
    %c0_i32 = arith.constant 0 : i32
    %c0_i32_0 = arith.constant 0 : i32
    %c0_i32_1 = arith.constant 0 : i32
    return %c0_i32, %arg0, %c0_i32_0 : i32, i32, i32
  }
  func.func @transform_1(%arg0: i32) -> (i32, i32) {
    %c0_i32 = arith.constant 0 : i32
    %c0_i32_0 = arith.constant 0 : i32
    return %arg0, %c0_i32 : i32, i32
  }
  func.func @transform_2(%arg0: i32) -> (i32, i32) {
    %c0_i32 = arith.constant 0 : i32
    %c0_i32_0 = arith.constant 0 : i32
    %c0_i32_1 = arith.constant 0 : i32
    return %c0_i32, %c0_i32_0 : i32, i32
  }
  func.func @transform_3(%arg0: i32) -> (i32, i32) {
    %c0_i32 = arith.constant 0 : i32
    %c0_i32_0 = arith.constant 0 : i32
    %c0_i32_1 = arith.constant 0 : i32
    return %c0_i32, %c0_i32_0 : i32, i32
  }
}

</mosaic_0001>

<llo_original>
// kernel: tpu_custom_call.1
$region0: #{tpu_custom_call.1}
  #allocation0 [shape = 'u32[]', space=smem, size = 0x4, offset = 0x4, fixed_abs, tag = 'smem constant byte address 0x4 - core index']
  #allocation1 [shape = 'u32[144,128]{1,0:T(1,128)}', space=vmem, size = 0x12000, scoped, tag = 'internal scratch']
  %s0 = inlined_call_operand.hbm [shape: f32[2,32,32], index: 0, kind: input, shape index: {}]
  %s1 = inlined_call_operand.vmem [shape: f32[32,2], index: 1, kind: input, shape index: {}]
  %s2 = inlined_call_operand.vmem [shape: f32[2,32], index: 2, kind: input, shape index: {}]
  %s3 = inlined_call_operand.hbm [shape: f32[1,1], index: 3, kind: output, shape index: {}]
  %s4 = sld [smem:[#allocation0]]
  $region30: #{tpu_custom_call.1} parent=0
    _
  %s6 = ssub.s32 1, %s4
  %s7 = scalar_select 0, %s6, %s4
  $region1: #{tpu_custom_call.1} parent=0
    #allocation2 [shape = 'u8[32768]{0}', space=vmem, size = 0x8000, scoped, tag = 'input window, operand 0, single buffered']
    #allocation3 [shape = 's32[1]{0}', space=sflag, size = 0x4, scoped, tag = 'scoped memory for tpu_custom_call.1']
    #allocation4 [shape = 's32[1]{0}', space=sflag, size = 0x4, scoped, tag = 'scoped memory for tpu_custom_call.1']
    #allocation5 [shape = 'u8[512]{0}', space=vmem, size = 0x400, scoped, tag = 'output window, operand 0, single buffered']
    %8 = vsyncpa [#allocation3], 0
    %9 = vsyncpa [#allocation4], 0
    // Predicated region
    $region2: #{tpu_custom_call.1} parent=1 // pred_check
      _
    $region3: #{tpu_custom_call.1} parent=1 // pred_check_branch
      %11 = sbr.rel (0) target = $region5
    $region4: #{tpu_custom_call.1} parent=1 // pred_region
      %s13 = ssub.s32 1024, 1024
      %14 = vsyncadd [#allocation3], %s13
      %s15 = sshll.u32 [#allocation2], 4
      %s16 = int_to_ptr.vmem [resolvable:$true] %s15
      %21 = dma.hbm_to_vmem [thread:$0]  %s0, 1024, %s16, [#allocation3], 128, 128, 8
    $region5: #{tpu_custom_call.1} parent=1 // pred_fallthru
      _
    // Predicated region
    $region6: #{tpu_custom_call.1} parent=1 // pred_check
      _
    $region7: #{tpu_custom_call.1} parent=1 // pred_check_branch
      %23 = sbr.rel (0) target = $region9
    $region8: #{tpu_custom_call.1} parent=1 // pred_region
      _
    $region9: #{tpu_custom_call.1} parent=1 // pred_fallthru
      _
    // Predicated region
    $region10: #{tpu_custom_call.1} parent=1 // pred_check
      _
    $region11: #{tpu_custom_call.1} parent=1 // pred_check_branch
      %25 = sbr.rel (0) target = $region13
    $region12: #{tpu_custom_call.1} parent=1 // pred_region
      _
    $region13: #{tpu_custom_call.1} parent=1 // pred_fallthru
      _
    // Predicated region
    $region14: #{tpu_custom_call.1} parent=1 // pred_check
      _
    $region15: #{tpu_custom_call.1} parent=1 // pred_check_branch
      %27 = sbr.rel (0) target = $region17
    $region16: #{tpu_custom_call.1} parent=1 // pred_region
      %28 = dma.done [#allocation3], 1024
    $region17: #{tpu_custom_call.1} parent=1 // pred_fallthru
      _
    %p29 = scmp.eq.s32.totalorder 0, 0
    // Predicated region
    $region18: #{tpu_custom_call.1} parent=1 // pred_check
      %p30 = pneg %p29
    $region19: #{tpu_custom_call.1} parent=1 // pred_check_branch
      %32 = sbr.rel (%p30) target = $region21
    $region20: #{tpu_custom_call.1} parent=1 // pred_region
      %vm33 = vcmask 0
      %34 = vst.msk [vmem:[#allocation5] sm:$0x1] %vm33, 0.0
    $region21: #{tpu_custom_call.1} parent=1 // pred_fallthru
      _
    %v35 = vld [vmem:[#allocation2] sm:$0xff]
    %v36 = vld [vmem:[#allocation2 + $0x8] sm:$0xff]
    %v37 = vld [vmem:[#allocation2 + $0x10] sm:$0xff]
    %v38 = vld [vmem:[#allocation2 + $0x18] sm:$0xff]
    %s39 = scalar_lea.vmem [#allocation2], 32
    %v40 = vld [vmem:[%s39] sm:$0xff]
    %v41 = vld [vmem:[%s39 + $0x8] sm:$0xff]
    %v42 = vld [vmem:[%s39 + $0x10] sm:$0xff]
    %v43 = vld [vmem:[%s39 + $0x18] sm:$0xff]
    %v44 = vld [vmem:[%s1] sm:$0xff]
    %v45 = vld [vmem:[%s1 + $0x8] sm:$0xff]
    %v46 = vld [vmem:[%s1 + $0x10] sm:$0xff]
    %v47 = vld [vmem:[%s1 + $0x18] sm:$0xff]
    %v48 = vld [vmem:[%s2] sm:$0x1]
    %v49 = vld [vmem:[%s2 + $0x1] sm:$0x1]
    %51 = vset.pattern.permute.xlu0 0
    %52 = vperm.xlu0 %51, %v44
    %v53 = vpop.permute.xlu0 %52
    %56 = vset.pattern.permute.xlu0 0
    %57 = vperm.xlu0 %56, %v45
    %v58 = vpop.permute.xlu0 %57
    %61 = vset.pattern.permute.xlu0 0
    %62 = vperm.xlu0 %61, %v46
    %v63 = vpop.permute.xlu0 %62
    %66 = vset.pattern.permute.xlu0 0
    %67 = vperm.xlu0 %66, %v47
    %v68 = vpop.permute.xlu0 %67
    %v70 = vlaneseq
    %v71 = vshrl.u32 %v70, 7
    %v72 = vsub.s32 0, %v71
    %v73 = vrot.slane %v48, %v72
    %v74 = vmul.f32 %v53, %v73
    %v75 = vmul.f32 %v58, %v73
    %v76 = vmul.f32 %v63, %v73
    %v77 = vmul.f32 %v68, %v73
    %78 = vset.pattern.permute.xlu0 1
    %79 = vperm.xlu0 %78, %v44
    %v80 = vpop.permute.xlu0 %79
    %82 = vset.pattern.permute.xlu0 1
    %83 = vperm.xlu0 %82, %v45
    %v84 = vpop.permute.xlu0 %83
    %86 = vset.pattern.permute.xlu0 1
    %87 = vperm.xlu0 %86, %v46
    %v88 = vpop.permute.xlu0 %87
    %90 = vset.pattern.permute.xlu0 1
    %91 = vperm.xlu0 %90, %v47
    %v92 = vpop.permute.xlu0 %91
    %v94 = vlaneseq
    %v95 = vshrl.u32 %v94, 7
    %v96 = vsub.s32 0, %v95
    %v97 = vrot.slane %v49, %v96
    %v98 = vmul.f32 %v80, %v97
    %v99 = vmul.f32 %v84, %v97
    %v100 = vmul.f32 %v88, %v97
    %v101 = vmul.f32 %v92, %v97
    %v102 = vadd.f32 %v74, %v98
    %v103 = vadd.f32 %v75, %v99
    %v104 = vadd.f32 %v76, %v100
    %v105 = vadd.f32 %v77, %v101
    %v106 = vmul.f32 %v53, %v97
    %v107 = vmul.f32 %v58, %v97
    %v108 = vmul.f32 %v63, %v97
    %v109 = vmul.f32 %v68, %v97
    %v110 = vmul.f32 %v80, %v73
    %v111 = vmul.f32 %v84, %v73
    %v112 = vmul.f32 %v88, %v73
    %v113 = vmul.f32 %v92, %v73
    %v114 = vsub.f32 %v106, %v110
    %v115 = vsub.f32 %v107, %v111
    %v116 = vsub.f32 %v108, %v112
    %v117 = vsub.f32 %v109, %v113
    %v118 = vld [vmem:[#allocation5] sm:$0x1]
    %v119 = vmul.f32 %v35, %v102
    %v120 = vmul.f32 %v36, %v103
    %v121 = vmul.f32 %v37, %v104
    %v122 = vmul.f32 %v38, %v105
    %v123 = vmul.f32 %v40, %v114
    %v124 = vmul.f32 %v41, %v115
    %v125 = vmul.f32 %v42, %v116
    %v126 = vmul.f32 %v43, %v117
    %v127 = vsub.f32 %v119, %v123
    %v128 = vsub.f32 %v120, %v124
    %v129 = vsub.f32 %v121, %v125
    %v130 = vsub.f32 %v122, %v126
    %vm131 = vcmask 261120
    %v132 = vsel %vm131, %v127, 0.0
    %v133 = vsel %vm131, %v128, 0.0
    %v134 = vadd.f32 %v132, %v133
    %v135 = vsel %vm131, %v129, 0.0
    %v136 = vadd.f32 %v134, %v135
    %v137 = vsel %vm131, %v130, 0.0
    %v138 = vadd.f32 %v136, %v137
    %139 = vadd.xlane.f32.xlu0 %v138
    %v140 = vpop.xlane.xlu0 %139
    %v141 = vrot.slane %v140, 4
    %v142 = vadd.f32 %v140, %v141
    %v143 = vrot.slane %v142, 2
    %v144 = vadd.f32 %v142, %v143
    %v145 = vrot.slane %v144, 1
    %v146 = vadd.f32 %v144, %v145
    %s147 = vtos %v146
    %v148 = vstv %s147
    %v149 = vadd.f32 %v118, %v148
    %vm150 = vcmask 0
    %151 = vst.msk [vmem:[#allocation5] sm:$0x1] %vm150, %v149
    // Predicated region
    $region22: #{tpu_custom_call.1} parent=1 // pred_check
      _
    $region23: #{tpu_custom_call.1} parent=1 // pred_check_branch
      %153 = sbr.rel (0) target = $region25
    $region24: #{tpu_custom_call.1} parent=1 // pred_region
      %s155 = ssub.s32 16, 16
      %156 = vsyncadd [#allocation4], %s155
      %s158 = sshll.u32 [#allocation5], 4
      %s159 = int_to_ptr.vmem [resolvable:$true] %s158
      %161 = dma.vmem_to_hbm [thread:$0]  %s159, 16, %s3, [#allocation4]
    $region25: #{tpu_custom_call.1} parent=1 // pred_fallthru
      _
    // Predicated region
    $region26: #{tpu_custom_call.1} parent=1 // pred_check
      _
    $region27: #{tpu_custom_call.1} parent=1 // pred_check_branch
      %163 = sbr.rel (0) target = $region29
    $region28: #{tpu_custom_call.1} parent=1 // pred_region
      %164 = dma.done [#allocation4], 16
    $region29: #{tpu_custom_call.1} parent=1 // pred_fallthru
      _
    %165 = vsyncpa [#allocation3], 1
    %166 = vsyncpa [#allocation4], 1

</llo_original>
